<compile_context>
chip_gen: v5e
topology: v5e:2x2
jax: 0.10.0
libtpu: 0.0.40
codegen_flags: <defaults>
</compile_context>

<pallas_src>
import functools

import jax
import jax.numpy as jnp
from jax.experimental import pallas as pl
from jax.experimental.pallas import tpu as pltpu

LANES = 128
SUBLANES = 8


def _pad_rows(r):
    return ((r + SUBLANES - 1) // SUBLANES) * SUBLANES


def _slab_layout(T, N, F, H, C):
    """Row layout of the packed parameter slab.  Every block starts at a
    sublane-aligned (multiple-of-8) row offset and at lane offset 0."""
    sizes = {
        "avg":   (T, T * N),        # per-timestep node-mean matrix
        "w_gcn": (F, H),
        "b_gcn": (1, H),
        "w_ih":  (H, 3 * H),
        "w_hh":  (H, 3 * H),
        "b_ih":  (1, 3 * H),
        "b_hh":  (1, 3 * H),
        "w_cls": (H, C),
        "b_cls": (1, C),
    }
    layout, off = {}, 0
    for k, (r, c) in sizes.items():
        layout[k] = (off, r, c)
        off += _pad_rows(r)
    return layout, off


def _pack_params(params, T, N):
    """Pack all small tensors into one (rows, 128) f32 slab (single DMA)."""
    F, H = params["w_gcn"].shape
    C = params["w_cls"].shape[1]
    assert T * N <= LANES, "block-diagonal trick requires T*N <= 128 lanes"
    layout, _ = _slab_layout(T, N, F, H, C)

    # Averaging matrix: row t averages the N nodes of timestep t (constant).
    avg = jnp.kron(jnp.eye(T, dtype=jnp.float32),
                   jnp.full((1, N), 1.0 / N, jnp.float32))            # (T, T*N)
    tensors = dict(params, avg=avg)

    blocks = []
    for k, (_, r, c) in layout.items():
        t = tensors[k].astype(jnp.float32)
        blocks.append(jnp.pad(t, ((0, _pad_rows(r) - r), (0, LANES - c))))
    return jnp.concatenate(blocks, axis=0), layout


# ---------------------------------------------------------------------------
# Fused kernel: block-diag GCN + ReLU + node-mean + GRU + clamp + classifier
# ---------------------------------------------------------------------------
def temporal_gnn_kernel(a_blk_ref, x_ref, p_ref, out_ref,
                        *, layout, T, N, F, H, C):
    # a_blk_ref: (T*N, T*N)   x_ref: (T*N, F)   p_ref: (rows, 128) param slab
    def view(name, rows, cols):
        off, _, _ = layout[name]
        return p_ref[off:off + rows, :cols]          # static slice: free

    avg   = view("avg",   T, T * N)                  # (T, T*N)
    w_gcn = view("w_gcn", F, H)
    b_gcn = view("b_gcn", 1, H)
    w_ih  = view("w_ih",  H, 3 * H)
    w_hh  = view("w_hh",  H, 3 * H)
    b_ih  = view("b_ih",  1, 3 * H)
    b_hh  = view("b_hh",  1, 3 * H)
    w_cls = view("w_cls", H, C)
    b_cls = view("b_cls", 1, C)

    # ---- GCN for all T timesteps in one shot (lane-dense 128-wide matmuls) --
    xw = jnp.dot(x_ref[...], w_gcn, preferred_element_type=jnp.float32)   # (T*N, H)
    h_all = jnp.dot(a_blk_ref[...], xw,
                    preferred_element_type=jnp.float32) + b_gcn
    h_all = jnp.maximum(h_all, 0.0)                                        # ReLU

    # per-timestep node mean: (T, T*N) @ (T*N, H) -> (T, H)
    emb = jnp.dot(avg, h_all, preferred_element_type=jnp.float32)

    # ---- GRU: input projection hoisted out of the recurrence ---------------
    gi_all = jnp.dot(emb, w_ih, preferred_element_type=jnp.float32) + b_ih  # (T, 3H)

    h = jnp.zeros((1, H), jnp.float32)
    for t in range(T):                                 # fully unrolled (T static)
        gi = gi_all[t:t + 1, :]                        # (1, 3H) static slice
        gh = jnp.dot(h, w_hh, preferred_element_type=jnp.float32) + b_hh
        # one EUP sigmoid over the combined r|z lane range (fewer lane slices)
        rz = jax.nn.sigmoid(gi[:, :2 * H] + gh[:, :2 * H])
        r = rz[:, :H]
        z = rz[:, H:2 * H]
        n = jnp.tanh(gi[:, 2 * H:] + r * gh[:, 2 * H:])
        h = (1.0 - z) * n + z * h

    # ---- clamp + classifier -------------------------------------------------
    h = jnp.clip(h, -10.0, 10.0)
    out_ref[...] = jnp.dot(h, w_cls, preferred_element_type=jnp.float32) + b_cls


# ---------------------------------------------------------------------------
# Wrapper (jitted): lane-dense operands + single fused pallas_call
# ---------------------------------------------------------------------------
@jax.jit
def temporal_gnn_forward(adj, x_seq, params):
    T, N, F = x_seq.shape
    H = params["w_gcn"].shape[1]
    C = params["w_cls"].shape[1]

    # Block-diagonal adjacency (T*N, T*N) via a single broadcast-multiply.
    eye_t = jnp.eye(T, dtype=jnp.float32)
    a_blk = (eye_t[:, None, :, None] * adj[:, :, None, :]).reshape(T * N, T * N)
    x_flat = x_seq.reshape(T * N, F).astype(jnp.float32)

    slab, layout = _pack_params(params, T, N)

    kernel = functools.partial(temporal_gnn_kernel, layout=layout,
                               T=T, N=N, F=F, H=H, C=C)
    vmem = pl.BlockSpec(memory_space=pltpu.MemorySpace.VMEM)
    return pl.pallas_call(
        kernel,
        out_shape=jax.ShapeDtypeStruct((1, C), jnp.float32),
        in_specs=[vmem, vmem, vmem],
        out_specs=vmem,
    )(a_blk, x_flat, slab)


# ---------------------------------------------------------------------------
# Pure-JAX reference (mirrors the PyTorch forward semantics exactly)
# ---------------------------------------------------------------------------
def reference_forward(adj, x_seq, params):
    H = params["w_gcn"].shape[1]
    h = jnp.einsum("tnm,tmf,fh->tnh", adj, x_seq, params["w_gcn"]) + params["b_gcn"]
    h = jnp.maximum(h, 0.0)
    emb = h.mean(axis=1)                                               # (T, H)
    hstate = jnp.zeros((1, H), jnp.float32)
    for t in range(emb.shape[0]):
        x = emb[t:t + 1]
        gi = x @ params["w_ih"] + params["b_ih"]
        gh = hstate @ params["w_hh"] + params["b_hh"]
        r = jax.nn.sigmoid(gi[:, :H] + gh[:, :H])
        z = jax.nn.sigmoid(gi[:, H:2 * H] + gh[:, H:2 * H])
        n = jnp.tanh(gi[:, 2 * H:] + r * gh[:, 2 * H:])
        hstate = (1.0 - z) * n + z * hstate
    hstate = jnp.clip(hstate, -10.0, 10.0)
    return hstate @ params["w_cls"] + params["b_cls"]


# ---------------------------------------------------------------------------
# Glue: GCN symmetric normalization from edge_index (done once, in plain JAX)
# ---------------------------------------------------------------------------
def normalized_adj(edge_index, n):
    src, dst = edge_index
    a = jnp.zeros((n, n), jnp.float32)
    a = a.at[dst, src].set(1.0)
    a = a.at[src, dst].set(1.0)          # treat graph as undirected
    a = jnp.minimum(a + jnp.eye(n, dtype=jnp.float32), 1.0)   # add self loops
    deg = a.sum(axis=1)
    dinv = 1.0 / jnp.sqrt(deg)
    return a * dinv[:, None] * dinv[None, :]


if __name__ == "__main__":
    # Small shapes consistent with the module's forward
    T, N, F, H, C = 8, 16, 4, 16, 5       # seq len, nodes/graph, node_features, hidden_dim, num_classes
    E = 24                                # edges per graph

    key = jax.random.PRNGKey(0)
    keys = jax.random.split(key, 12)

    # Deterministic synthetic graph sequence
    x_seq = jax.random.normal(keys[0], (T, N, F), jnp.float32)
    src = jax.random.randint(keys[1], (T, E), 0, N)
    dst = jax.random.randint(keys[2], (T, E), 0, N)
    adj = jnp.stack([normalized_adj((src[t], dst[t]), N) for t in range(T)])   # (T, N, N)

    # Deterministic parameters (shapes from the module's __init__)
    s = 0.1
    params = {
        "w_gcn": s * jax.random.normal(keys[3], (F, H), jnp.float32),
        "b_gcn": s * jax.random.normal(keys[4], (1, H), jnp.float32),
        "w_ih":  s * jax.random.normal(keys[5], (H, 3 * H), jnp.float32),   # W_{ir|iz|in}^T
        "w_hh":  s * jax.random.normal(keys[6], (H, 3 * H), jnp.float32),   # W_{hr|hz|hn}^T
        "b_ih":  s * jax.random.normal(keys[7], (1, 3 * H), jnp.float32),
        "b_hh":  s * jax.random.normal(keys[8], (1, 3 * H), jnp.float32),
        "w_cls": s * jax.random.normal(keys[9], (H, C), jnp.float32),
        "b_cls": s * jax.random.normal(keys[10], (1, C), jnp.float32),
    }

    out = jax.block_until_ready(temporal_gnn_forward(adj, x_seq, params))
    ref = jax.block_until_ready(reference_forward(adj, x_seq, params))

    assert out.shape == (1, C), out.shape
    assert jnp.allclose(out, ref, atol=1e-4, rtol=1e-4), (out, ref)
    print("KERNEL_OK")
</pallas_src>

<mosaic_0001>
module attributes {stable_mosaic.version = 11 : i64} {
  func.func @temporal_gnn_kernel(%arg0: memref<128x128xf32, #tpu.memory_space<vmem>>, %arg1: memref<128x4xf32, #tpu.memory_space<vmem>>, %arg2: memref<96x128xf32, #tpu.memory_space<vmem>>, %arg3: memref<1x5xf32, #tpu.memory_space<vmem>>) attributes {dimension_semantics = [], scalar_prefetch = 0 : i64, scratch_operands = 0 : i64, tpu.core_type = #tpu.core_type<tc>} {
    %c0 = arith.constant 0 : index
    %c0_0 = arith.constant 0 : index
    %0 = vector.load %arg2[%c0, %c0_0] : memref<96x128xf32, #tpu.memory_space<vmem>>, vector<8x128xf32>
    %c8 = arith.constant 8 : index
    %c0_1 = arith.constant 0 : index
    %1 = vector.load %arg2[%c8, %c0_1] : memref<96x128xf32, #tpu.memory_space<vmem>>, vector<4x16xf32>
    %c16 = arith.constant 16 : index
    %c0_2 = arith.constant 0 : index
    %2 = vector.load %arg2[%c16, %c0_2] : memref<96x128xf32, #tpu.memory_space<vmem>>, vector<1x16xf32>
    %c24 = arith.constant 24 : index
    %c0_3 = arith.constant 0 : index
    %3 = vector.load %arg2[%c24, %c0_3] : memref<96x128xf32, #tpu.memory_space<vmem>>, vector<16x48xf32>
    %c40 = arith.constant 40 : index
    %c0_4 = arith.constant 0 : index
    %4 = vector.load %arg2[%c40, %c0_4] : memref<96x128xf32, #tpu.memory_space<vmem>>, vector<16x48xf32>
    %c56 = arith.constant 56 : index
    %c0_5 = arith.constant 0 : index
    %5 = vector.load %arg2[%c56, %c0_5] : memref<96x128xf32, #tpu.memory_space<vmem>>, vector<1x48xf32>
    %c64 = arith.constant 64 : index
    %c0_6 = arith.constant 0 : index
    %6 = vector.load %arg2[%c64, %c0_6] : memref<96x128xf32, #tpu.memory_space<vmem>>, vector<1x48xf32>
    %c72 = arith.constant 72 : index
    %c0_7 = arith.constant 0 : index
    %7 = vector.load %arg2[%c72, %c0_7] : memref<96x128xf32, #tpu.memory_space<vmem>>, vector<16x5xf32>
    %c88 = arith.constant 88 : index
    %c0_8 = arith.constant 0 : index
    %8 = vector.load %arg2[%c88, %c0_8] : memref<96x128xf32, #tpu.memory_space<vmem>>, vector<1x5xf32>
    %c0_9 = arith.constant 0 : index
    %c0_10 = arith.constant 0 : index
    %9 = vector.load %arg1[%c0_9, %c0_10] : memref<128x4xf32, #tpu.memory_space<vmem>>, vector<128x4xf32>
    %cst = arith.constant dense<0.000000e+00> : vector<128x16xf32>
    %10 = tpu.matmul %9, %1, %cst {dimension_numbers = #tpu.dot_dimension_numbers<[1], [0], [0], [1], [0, 0, 1, 1], [], []>} : vector<128x4xf32>, vector<4x16xf32>, vector<128x16xf32> -> vector<128x16xf32>
    %c0_11 = arith.constant 0 : index
    %c0_12 = arith.constant 0 : index
    %11 = vector.load %arg0[%c0_11, %c0_12] : memref<128x128xf32, #tpu.memory_space<vmem>>, vector<128x128xf32>
    %cst_13 = arith.constant dense<0.000000e+00> : vector<128x16xf32>
    %12 = tpu.matmul %11, %10, %cst_13 {dimension_numbers = #tpu.dot_dimension_numbers<[1], [0], [0], [1], [0, 0, 1, 1], [], []>} : vector<128x128xf32>, vector<128x16xf32>, vector<128x16xf32> -> vector<128x16xf32>
    %13 = vector.broadcast %2 : vector<1x16xf32> to vector<128x16xf32>
    %14 = arith.addf %12, %13 : vector<128x16xf32>
    %cst_14 = arith.constant 0.000000e+00 : f32
    %15 = vector.broadcast %cst_14 : f32 to vector<128x16xf32>
    %16 = arith.maximumf %14, %15 : vector<128x16xf32>
    %cst_15 = arith.constant dense<0.000000e+00> : vector<8x16xf32>
    %17 = tpu.matmul %0, %16, %cst_15 {dimension_numbers = #tpu.dot_dimension_numbers<[1], [0], [0], [1], [0, 0, 1, 1], [], []>} : vector<8x128xf32>, vector<128x16xf32>, vector<8x16xf32> -> vector<8x16xf32>
    %cst_16 = arith.constant dense<0.000000e+00> : vector<8x48xf32>
    %18 = tpu.matmul %17, %3, %cst_16 {dimension_numbers = #tpu.dot_dimension_numbers<[1], [0], [0], [1], [0, 0, 1, 1], [], []>} : vector<8x16xf32>, vector<16x48xf32>, vector<8x48xf32> -> vector<8x48xf32>
    %19 = vector.broadcast %5 : vector<1x48xf32> to vector<8x48xf32>
    %20 = arith.addf %18, %19 : vector<8x48xf32>
    %cst_17 = arith.constant 0.000000e+00 : f32
    %21 = vector.broadcast %cst_17 : f32 to vector<1x16xf32>
    %22 = vector.extract_strided_slice %20 {offsets = [0, 0], sizes = [1, 48], strides = [1, 1]} : vector<8x48xf32> to vector<1x48xf32>
    %cst_18 = arith.constant dense<0.000000e+00> : vector<1x48xf32>
    %23 = tpu.matmul %21, %4, %cst_18 {dimension_numbers = #tpu.dot_dimension_numbers<[1], [0], [0], [1], [0, 0, 1, 1], [], []>} : vector<1x16xf32>, vector<16x48xf32>, vector<1x48xf32> -> vector<1x48xf32>
    %24 = arith.addf %23, %6 : vector<1x48xf32>
    %25 = vector.extract_strided_slice %22 {offsets = [0, 0], sizes = [1, 32], strides = [1, 1]} : vector<1x48xf32> to vector<1x32xf32>
    %26 = vector.extract_strided_slice %24 {offsets = [0, 0], sizes = [1, 32], strides = [1, 1]} : vector<1x48xf32> to vector<1x32xf32>
    %27 = arith.addf %25, %26 : vector<1x32xf32>
    %28 = arith.negf %27 : vector<1x32xf32>
    %29 = math.exp %28 : vector<1x32xf32>
    %cst_19 = arith.constant 1.000000e+00 : f32
    %30 = vector.broadcast %cst_19 : f32 to vector<1x32xf32>
    %31 = arith.addf %30, %29 : vector<1x32xf32>
    %32 = arith.divf %30, %31 : vector<1x32xf32>
    %33 = vector.extract_strided_slice %32 {offsets = [0, 0], sizes = [1, 16], strides = [1, 1]} : vector<1x32xf32> to vector<1x16xf32>
    %34 = vector.extract_strided_slice %32 {offsets = [0, 16], sizes = [1, 16], strides = [1, 1]} : vector<1x32xf32> to vector<1x16xf32>
    %35 = vector.extract_strided_slice %22 {offsets = [0, 32], sizes = [1, 16], strides = [1, 1]} : vector<1x48xf32> to vector<1x16xf32>
    %36 = vector.extract_strided_slice %24 {offsets = [0, 32], sizes = [1, 16], strides = [1, 1]} : vector<1x48xf32> to vector<1x16xf32>
    %37 = arith.mulf %33, %36 : vector<1x16xf32>
    %38 = arith.addf %35, %37 : vector<1x16xf32>
    %39 = math.tanh %38 : vector<1x16xf32>
    %cst_20 = arith.constant 1.000000e+00 : f32
    %40 = vector.broadcast %cst_20 : f32 to vector<1x16xf32>
    %41 = arith.subf %40, %34 : vector<1x16xf32>
    %42 = arith.mulf %41, %39 : vector<1x16xf32>
    %43 = arith.mulf %34, %21 : vector<1x16xf32>
    %44 = arith.addf %42, %43 : vector<1x16xf32>
    %45 = vector.extract_strided_slice %20 {offsets = [1, 0], sizes = [1, 48], strides = [1, 1]} : vector<8x48xf32> to vector<1x48xf32>
    %cst_21 = arith.constant dense<0.000000e+00> : vector<1x48xf32>
    %46 = tpu.matmul %44, %4, %cst_21 {dimension_numbers = #tpu.dot_dimension_numbers<[1], [0], [0], [1], [0, 0, 1, 1], [], []>} : vector<1x16xf32>, vector<16x48xf32>, vector<1x48xf32> -> vector<1x48xf32>
    %47 = arith.addf %46, %6 : vector<1x48xf32>
    %48 = vector.extract_strided_slice %45 {offsets = [0, 0], sizes = [1, 32], strides = [1, 1]} : vector<1x48xf32> to vector<1x32xf32>
    %49 = vector.extract_strided_slice %47 {offsets = [0, 0], sizes = [1, 32], strides = [1, 1]} : vector<1x48xf32> to vector<1x32xf32>
    %50 = arith.addf %48, %49 : vector<1x32xf32>
    %51 = arith.negf %50 : vector<1x32xf32>
    %52 = math.exp %51 : vector<1x32xf32>
    %cst_22 = arith.constant 1.000000e+00 : f32
    %53 = vector.broadcast %cst_22 : f32 to vector<1x32xf32>
    %54 = arith.addf %53, %52 : vector<1x32xf32>
    %55 = arith.divf %53, %54 : vector<1x32xf32>
    %56 = vector.extract_strided_slice %55 {offsets = [0, 0], sizes = [1, 16], strides = [1, 1]} : vector<1x32xf32> to vector<1x16xf32>
    %57 = vector.extract_strided_slice %55 {offsets = [0, 16], sizes = [1, 16], strides = [1, 1]} : vector<1x32xf32> to vector<1x16xf32>
    %58 = vector.extract_strided_slice %45 {offsets = [0, 32], sizes = [1, 16], strides = [1, 1]} : vector<1x48xf32> to vector<1x16xf32>
    %59 = vector.extract_strided_slice %47 {offsets = [0, 32], sizes = [1, 16], strides = [1, 1]} : vector<1x48xf32> to vector<1x16xf32>
    %60 = arith.mulf %56, %59 : vector<1x16xf32>
    %61 = arith.addf %58, %60 : vector<1x16xf32>
    %62 = math.tanh %61 : vector<1x16xf32>
    %cst_23 = arith.constant 1.000000e+00 : f32
    %63 = vector.broadcast %cst_23 : f32 to vector<1x16xf32>
    %64 = arith.subf %63, %57 : vector<1x16xf32>
    %65 = arith.mulf %64, %62 : vector<1x16xf32>
    %66 = arith.mulf %57, %44 : vector<1x16xf32>
    %67 = arith.addf %65, %66 : vector<1x16xf32>
    %68 = vector.extract_strided_slice %20 {offsets = [2, 0], sizes = [1, 48], strides = [1, 1]} : vector<8x48xf32> to vector<1x48xf32>
    %cst_24 = arith.constant dense<0.000000e+00> : vector<1x48xf32>
    %69 = tpu.matmul %67, %4, %cst_24 {dimension_numbers = #tpu.dot_dimension_numbers<[1], [0], [0], [1], [0, 0, 1, 1], [], []>} : vector<1x16xf32>, vector<16x48xf32>, vector<1x48xf32> -> vector<1x48xf32>
    %70 = arith.addf %69, %6 : vector<1x48xf32>
    %71 = vector.extract_strided_slice %68 {offsets = [0, 0], sizes = [1, 32], strides = [1, 1]} : vector<1x48xf32> to vector<1x32xf32>
    %72 = vector.extract_strided_slice %70 {offsets = [0, 0], sizes = [1, 32], strides = [1, 1]} : vector<1x48xf32> to vector<1x32xf32>
    %73 = arith.addf %71, %72 : vector<1x32xf32>
    %74 = arith.negf %73 : vector<1x32xf32>
    %75 = math.exp %74 : vector<1x32xf32>
    %cst_25 = arith.constant 1.000000e+00 : f32
    %76 = vector.broadcast %cst_25 : f32 to vector<1x32xf32>
    %77 = arith.addf %76, %75 : vector<1x32xf32>
    %78 = arith.divf %76, %77 : vector<1x32xf32>
    %79 = vector.extract_strided_slice %78 {offsets = [0, 0], sizes = [1, 16], strides = [1, 1]} : vector<1x32xf32> to vector<1x16xf32>
    %80 = vector.extract_strided_slice %78 {offsets = [0, 16], sizes = [1, 16], strides = [1, 1]} : vector<1x32xf32> to vector<1x16xf32>
    %81 = vector.extract_strided_slice %68 {offsets = [0, 32], sizes = [1, 16], strides = [1, 1]} : vector<1x48xf32> to vector<1x16xf32>
    %82 = vector.extract_strided_slice %70 {offsets = [0, 32], sizes = [1, 16], strides = [1, 1]} : vector<1x48xf32> to vector<1x16xf32>
    %83 = arith.mulf %79, %82 : vector<1x16xf32>
    %84 = arith.addf %81, %83 : vector<1x16xf32>
    %85 = math.tanh %84 : vector<1x16xf32>
    %cst_26 = arith.constant 1.000000e+00 : f32
    %86 = vector.broadcast %cst_26 : f32 to vector<1x16xf32>
    %87 = arith.subf %86, %80 : vector<1x16xf32>
    %88 = arith.mulf %87, %85 : vector<1x16xf32>
    %89 = arith.mulf %80, %67 : vector<1x16xf32>
    %90 = arith.addf %88, %89 : vector<1x16xf32>
    %91 = vector.extract_strided_slice %20 {offsets = [3, 0], sizes = [1, 48], strides = [1, 1]} : vector<8x48xf32> to vector<1x48xf32>
    %cst_27 = arith.constant dense<0.000000e+00> : vector<1x48xf32>
    %92 = tpu.matmul %90, %4, %cst_27 {dimension_numbers = #tpu.dot_dimension_numbers<[1], [0], [0], [1], [0, 0, 1, 1], [], []>} : vector<1x16xf32>, vector<16x48xf32>, vector<1x48xf32> -> vector<1x48xf32>
    %93 = arith.addf %92, %6 : vector<1x48xf32>
    %94 = vector.extract_strided_slice %91 {offsets = [0, 0], sizes = [1, 32], strides = [1, 1]} : vector<1x48xf32> to vector<1x32xf32>
    %95 = vector.extract_strided_slice %93 {offsets = [0, 0], sizes = [1, 32], strides = [1, 1]} : vector<1x48xf32> to vector<1x32xf32>
    %96 = arith.addf %94, %95 : vector<1x32xf32>
    %97 = arith.negf %96 : vector<1x32xf32>
    %98 = math.exp %97 : vector<1x32xf32>
    %cst_28 = arith.constant 1.000000e+00 : f32
    %99 = vector.broadcast %cst_28 : f32 to vector<1x32xf32>
    %100 = arith.addf %99, %98 : vector<1x32xf32>
    %101 = arith.divf %99, %100 : vector<1x32xf32>
    %102 = vector.extract_strided_slice %101 {offsets = [0, 0], sizes = [1, 16], strides = [1, 1]} : vector<1x32xf32> to vector<1x16xf32>
    %103 = vector.extract_strided_slice %101 {offsets = [0, 16], sizes = [1, 16], strides = [1, 1]} : vector<1x32xf32> to vector<1x16xf32>
    %104 = vector.extract_strided_slice %91 {offsets = [0, 32], sizes = [1, 16], strides = [1, 1]} : vector<1x48xf32> to vector<1x16xf32>
    %105 = vector.extract_strided_slice %93 {offsets = [0, 32], sizes = [1, 16], strides = [1, 1]} : vector<1x48xf32> to vector<1x16xf32>
    %106 = arith.mulf %102, %105 : vector<1x16xf32>
    %107 = arith.addf %104, %106 : vector<1x16xf32>
    %108 = math.tanh %107 : vector<1x16xf32>
    %cst_29 = arith.constant 1.000000e+00 : f32
    %109 = vector.broadcast %cst_29 : f32 to vector<1x16xf32>
    %110 = arith.subf %109, %103 : vector<1x16xf32>
    %111 = arith.mulf %110, %108 : vector<1x16xf32>
    %112 = arith.mulf %103, %90 : vector<1x16xf32>
    %113 = arith.addf %111, %112 : vector<1x16xf32>
    %114 = vector.extract_strided_slice %20 {offsets = [4, 0], sizes = [1, 48], strides = [1, 1]} : vector<8x48xf32> to vector<1x48xf32>
    %cst_30 = arith.constant dense<0.000000e+00> : vector<1x48xf32>
    %115 = tpu.matmul %113, %4, %cst_30 {dimension_numbers = #tpu.dot_dimension_numbers<[1], [0], [0], [1], [0, 0, 1, 1], [], []>} : vector<1x16xf32>, vector<16x48xf32>, vector<1x48xf32> -> vector<1x48xf32>
    %116 = arith.addf %115, %6 : vector<1x48xf32>
    %117 = vector.extract_strided_slice %114 {offsets = [0, 0], sizes = [1, 32], strides = [1, 1]} : vector<1x48xf32> to vector<1x32xf32>
    %118 = vector.extract_strided_slice %116 {offsets = [0, 0], sizes = [1, 32], strides = [1, 1]} : vector<1x48xf32> to vector<1x32xf32>
    %119 = arith.addf %117, %118 : vector<1x32xf32>
    %120 = arith.negf %119 : vector<1x32xf32>
    %121 = math.exp %120 : vector<1x32xf32>
    %cst_31 = arith.constant 1.000000e+00 : f32
    %122 = vector.broadcast %cst_31 : f32 to vector<1x32xf32>
    %123 = arith.addf %122, %121 : vector<1x32xf32>
    %124 = arith.divf %122, %123 : vector<1x32xf32>
    %125 = vector.extract_strided_slice %124 {offsets = [0, 0], sizes = [1, 16], strides = [1, 1]} : vector<1x32xf32> to vector<1x16xf32>
    %126 = vector.extract_strided_slice %124 {offsets = [0, 16], sizes = [1, 16], strides = [1, 1]} : vector<1x32xf32> to vector<1x16xf32>
    %127 = vector.extract_strided_slice %114 {offsets = [0, 32], sizes = [1, 16], strides = [1, 1]} : vector<1x48xf32> to vector<1x16xf32>
    %128 = vector.extract_strided_slice %116 {offsets = [0, 32], sizes = [1, 16], strides = [1, 1]} : vector<1x48xf32> to vector<1x16xf32>
    %129 = arith.mulf %125, %128 : vector<1x16xf32>
    %130 = arith.addf %127, %129 : vector<1x16xf32>
    %131 = math.tanh %130 : vector<1x16xf32>
    %cst_32 = arith.constant 1.000000e+00 : f32
    %132 = vector.broadcast %cst_32 : f32 to vector<1x16xf32>
    %133 = arith.subf %132, %126 : vector<1x16xf32>
    %134 = arith.mulf %133, %131 : vector<1x16xf32>
    %135 = arith.mulf %126, %113 : vector<1x16xf32>
    %136 = arith.addf %134, %135 : vector<1x16xf32>
    %137 = vector.extract_strided_slice %20 {offsets = [5, 0], sizes = [1, 48], strides = [1, 1]} : vector<8x48xf32> to vector<1x48xf32>
    %cst_33 = arith.constant dense<0.000000e+00> : vector<1x48xf32>
    %138 = tpu.matmul %136, %4, %cst_33 {dimension_numbers = #tpu.dot_dimension_numbers<[1], [0], [0], [1], [0, 0, 1, 1], [], []>} : vector<1x16xf32>, vector<16x48xf32>, vector<1x48xf32> -> vector<1x48xf32>
    %139 = arith.addf %138, %6 : vector<1x48xf32>
    %140 = vector.extract_strided_slice %137 {offsets = [0, 0], sizes = [1, 32], strides = [1, 1]} : vector<1x48xf32> to vector<1x32xf32>
    %141 = vector.extract_strided_slice %139 {offsets = [0, 0], sizes = [1, 32], strides = [1, 1]} : vector<1x48xf32> to vector<1x32xf32>
    %142 = arith.addf %140, %141 : vector<1x32xf32>
    %143 = arith.negf %142 : vector<1x32xf32>
    %144 = math.exp %143 : vector<1x32xf32>
    %cst_34 = arith.constant 1.000000e+00 : f32
    %145 = vector.broadcast %cst_34 : f32 to vector<1x32xf32>
    %146 = arith.addf %145, %144 : vector<1x32xf32>
    %147 = arith.divf %145, %146 : vector<1x32xf32>
    %148 = vector.extract_strided_slice %147 {offsets = [0, 0], sizes = [1, 16], strides = [1, 1]} : vector<1x32xf32> to vector<1x16xf32>
    %149 = vector.extract_strided_slice %147 {offsets = [0, 16], sizes = [1, 16], strides = [1, 1]} : vector<1x32xf32> to vector<1x16xf32>
    %150 = vector.extract_strided_slice %137 {offsets = [0, 32], sizes = [1, 16], strides = [1, 1]} : vector<1x48xf32> to vector<1x16xf32>
    %151 = vector.extract_strided_slice %139 {offsets = [0, 32], sizes = [1, 16], strides = [1, 1]} : vector<1x48xf32> to vector<1x16xf32>
    %152 = arith.mulf %148, %151 : vector<1x16xf32>
    %153 = arith.addf %150, %152 : vector<1x16xf32>
    %154 = math.tanh %153 : vector<1x16xf32>
    %cst_35 = arith.constant 1.000000e+00 : f32
    %155 = vector.broadcast %cst_35 : f32 to vector<1x16xf32>
    %156 = arith.subf %155, %149 : vector<1x16xf32>
    %157 = arith.mulf %156, %154 : vector<1x16xf32>
    %158 = arith.mulf %149, %136 : vector<1x16xf32>
    %159 = arith.addf %157, %158 : vector<1x16xf32>
    %160 = vector.extract_strided_slice %20 {offsets = [6, 0], sizes = [1, 48], strides = [1, 1]} : vector<8x48xf32> to vector<1x48xf32>
    %cst_36 = arith.constant dense<0.000000e+00> : vector<1x48xf32>
    %161 = tpu.matmul %159, %4, %cst_36 {dimension_numbers = #tpu.dot_dimension_numbers<[1], [0], [0], [1], [0, 0, 1, 1], [], []>} : vector<1x16xf32>, vector<16x48xf32>, vector<1x48xf32> -> vector<1x48xf32>
    %162 = arith.addf %161, %6 : vector<1x48xf32>
    %163 = vector.extract_strided_slice %160 {offsets = [0, 0], sizes = [1, 32], strides = [1, 1]} : vector<1x48xf32> to vector<1x32xf32>
    %164 = vector.extract_strided_slice %162 {offsets = [0, 0], sizes = [1, 32], strides = [1, 1]} : vector<1x48xf32> to vector<1x32xf32>
    %165 = arith.addf %163, %164 : vector<1x32xf32>
    %166 = arith.negf %165 : vector<1x32xf32>
    %167 = math.exp %166 : vector<1x32xf32>
    %cst_37 = arith.constant 1.000000e+00 : f32
    %168 = vector.broadcast %cst_37 : f32 to vector<1x32xf32>
    %169 = arith.addf %168, %167 : vector<1x32xf32>
    %170 = arith.divf %168, %169 : vector<1x32xf32>
    %171 = vector.extract_strided_slice %170 {offsets = [0, 0], sizes = [1, 16], strides = [1, 1]} : vector<1x32xf32> to vector<1x16xf32>
    %172 = vector.extract_strided_slice %170 {offsets = [0, 16], sizes = [1, 16], strides = [1, 1]} : vector<1x32xf32> to vector<1x16xf32>
    %173 = vector.extract_strided_slice %160 {offsets = [0, 32], sizes = [1, 16], strides = [1, 1]} : vector<1x48xf32> to vector<1x16xf32>
    %174 = vector.extract_strided_slice %162 {offsets = [0, 32], sizes = [1, 16], strides = [1, 1]} : vector<1x48xf32> to vector<1x16xf32>
    %175 = arith.mulf %171, %174 : vector<1x16xf32>
    %176 = arith.addf %173, %175 : vector<1x16xf32>
    %177 = math.tanh %176 : vector<1x16xf32>
    %cst_38 = arith.constant 1.000000e+00 : f32
    %178 = vector.broadcast %cst_38 : f32 to vector<1x16xf32>
    %179 = arith.subf %178, %172 : vector<1x16xf32>
    %180 = arith.mulf %179, %177 : vector<1x16xf32>
    %181 = arith.mulf %172, %159 : vector<1x16xf32>
    %182 = arith.addf %180, %181 : vector<1x16xf32>
    %183 = vector.extract_strided_slice %20 {offsets = [7, 0], sizes = [1, 48], strides = [1, 1]} : vector<8x48xf32> to vector<1x48xf32>
    %cst_39 = arith.constant dense<0.000000e+00> : vector<1x48xf32>
    %184 = tpu.matmul %182, %4, %cst_39 {dimension_numbers = #tpu.dot_dimension_numbers<[1], [0], [0], [1], [0, 0, 1, 1], [], []>} : vector<1x16xf32>, vector<16x48xf32>, vector<1x48xf32> -> vector<1x48xf32>
    %185 = arith.addf %184, %6 : vector<1x48xf32>
    %186 = vector.extract_strided_slice %183 {offsets = [0, 0], sizes = [1, 32], strides = [1, 1]} : vector<1x48xf32> to vector<1x32xf32>
    %187 = vector.extract_strided_slice %185 {offsets = [0, 0], sizes = [1, 32], strides = [1, 1]} : vector<1x48xf32> to vector<1x32xf32>
    %188 = arith.addf %186, %187 : vector<1x32xf32>
    %189 = arith.negf %188 : vector<1x32xf32>
    %190 = math.exp %189 : vector<1x32xf32>
    %cst_40 = arith.constant 1.000000e+00 : f32
    %191 = vector.broadcast %cst_40 : f32 to vector<1x32xf32>
    %192 = arith.addf %191, %190 : vector<1x32xf32>
    %193 = arith.divf %191, %192 : vector<1x32xf32>
    %194 = vector.extract_strided_slice %193 {offsets = [0, 0], sizes = [1, 16], strides = [1, 1]} : vector<1x32xf32> to vector<1x16xf32>
    %195 = vector.extract_strided_slice %193 {offsets = [0, 16], sizes = [1, 16], strides = [1, 1]} : vector<1x32xf32> to vector<1x16xf32>
    %196 = vector.extract_strided_slice %183 {offsets = [0, 32], sizes = [1, 16], strides = [1, 1]} : vector<1x48xf32> to vector<1x16xf32>
    %197 = vector.extract_strided_slice %185 {offsets = [0, 32], sizes = [1, 16], strides = [1, 1]} : vector<1x48xf32> to vector<1x16xf32>
    %198 = arith.mulf %194, %197 : vector<1x16xf32>
    %199 = arith.addf %196, %198 : vector<1x16xf32>
    %200 = math.tanh %199 : vector<1x16xf32>
    %cst_41 = arith.constant 1.000000e+00 : f32
    %201 = vector.broadcast %cst_41 : f32 to vector<1x16xf32>
    %202 = arith.subf %201, %195 : vector<1x16xf32>
    %203 = arith.mulf %202, %200 : vector<1x16xf32>
    %204 = arith.mulf %195, %182 : vector<1x16xf32>
    %205 = arith.addf %203, %204 : vector<1x16xf32>
    %cst_42 = arith.constant -1.000000e+01 : f32
    %cst_43 = arith.constant 1.000000e+01 : f32
    %206 = vector.broadcast %cst_42 : f32 to vector<1x16xf32>
    %207 = arith.maximumf %206, %205 : vector<1x16xf32>
    %208 = vector.broadcast %cst_43 : f32 to vector<1x16xf32>
    %209 = arith.minimumf %208, %207 : vector<1x16xf32>
    %cst_44 = arith.constant dense<0.000000e+00> : vector<1x5xf32>
    %210 = tpu.matmul %209, %7, %cst_44 {dimension_numbers = #tpu.dot_dimension_numbers<[1], [0], [0], [1], [0, 0, 1, 1], [], []>} : vector<1x16xf32>, vector<16x5xf32>, vector<1x5xf32> -> vector<1x5xf32>
    %211 = arith.addf %210, %8 : vector<1x5xf32>
    %c0_45 = arith.constant 0 : index
    %c0_46 = arith.constant 0 : index
    %212 = vector.load %arg3[%c0_45, %c0_46] : memref<1x5xf32, #tpu.memory_space<vmem>>, vector<1x5xf32>
    tpu.vector_store %arg3[%c0_45, %c0_46], %211 {strides = array<i32>} : memref<1x5xf32, #tpu.memory_space<vmem>>, vector<1x5xf32>,
    return
  }
}

</mosaic_0001>

<llo_original>
// kernel: temporal_gnn_forward.1
$region0: #{temporal_gnn_forward.1}
  #allocation0 [shape = 'u32[]', space=smem, size = 0x4, offset = 0x4, fixed_abs, tag = 'smem constant byte address 0x4 - core index']
  #allocation1 [shape = 'u32[72,128]{1,0:T(1,128)}', space=vmem, size = 0x9000, scoped, tag = 'internal scratch']
  %s0 = inlined_call_operand.vmem [shape: f32[128,128], index: 0, kind: input, shape index: {}]
  %s1 = inlined_call_operand.vmem [shape: f32[128,4], index: 1, kind: input, shape index: {}]
  %s2 = inlined_call_operand.vmem [shape: f32[96,128], index: 2, kind: input, shape index: {}]
  %s3 = inlined_call_operand.hbm [shape: f32[1,5], index: 3, kind: output, shape index: {}]
  %s4 = sld [smem:[#allocation0]]
  $region22: #{temporal_gnn_forward.1} parent=0
    _
  %s6 = ssub.s32 1, %s4
  %s7 = scalar_select 0, %s6, %s4
  $region1: #{temporal_gnn_forward.1} parent=0
    #allocation2 [shape = 'u8[512]{0}', space=vmem, size = 0x400, scoped, tag = 'output window, operand 0, single buffered']
    #allocation3 [shape = 's32[1]{0}', space=sflag, size = 0x4, scoped, tag = 'scoped memory for temporal_gnn_forward.1']
    %8 = vsyncpa [#allocation3], 0
    // Predicated region
    $region2: #{temporal_gnn_forward.1} parent=1 // pred_check
      _
    $region3: #{temporal_gnn_forward.1} parent=1 // pred_check_branch
      %10 = sbr.rel (0) target = $region5
    $region4: #{temporal_gnn_forward.1} parent=1 // pred_region
      _
    $region5: #{temporal_gnn_forward.1} parent=1 // pred_fallthru
      _
    // Predicated region
    $region6: #{temporal_gnn_forward.1} parent=1 // pred_check
      _
    $region7: #{temporal_gnn_forward.1} parent=1 // pred_check_branch
      %12 = sbr.rel (0) target = $region9
    $region8: #{temporal_gnn_forward.1} parent=1 // pred_region
      _
    $region9: #{temporal_gnn_forward.1} parent=1 // pred_fallthru
      _
    // Predicated region
    $region10: #{temporal_gnn_forward.1} parent=1 // pred_check
      _
    $region11: #{temporal_gnn_forward.1} parent=1 // pred_check_branch
      %14 = sbr.rel (0) target = $region13
    $region12: #{temporal_gnn_forward.1} parent=1 // pred_region
      _
    $region13: #{temporal_gnn_forward.1} parent=1 // pred_fallthru
      _
    %v15 = vld [vmem:[%s2] sm:$0xff]
    %v16 = vld [vmem:[%s2 + $0x8] sm:$0xf]
    %v17 = vld [vmem:[%s2 + $0x10] sm:$0x1]
    %v18 = vld [vmem:[%s2 + $0x18] sm:$0xff]
    %v19 = vld [vmem:[%s2 + $0x20] sm:$0xff]
    %v20 = vld [vmem:[%s2 + $0x28] sm:$0xff]
    %v21 = vld [vmem:[%s2 + $0x30] sm:$0xff]
    %v22 = vld [vmem:[%s2 + $0x38] sm:$0x1]
    %v23 = vld [vmem:[%s2 + $0x40] sm:$0x1]
    %v24 = vld [vmem:[%s2 + $0x48] sm:$0xff]
    %v25 = vld [vmem:[%s2 + $0x50] sm:$0xff]
    %v26 = vld [vmem:[%s2 + $0x58] sm:$0x1]
    %v27 = vld [vmem:[%s1] sm:$0xff]
    %v28 = vld [vmem:[%s1 + $0x8] sm:$0xff]
    %v29 = vld [vmem:[%s1 + $0x10] sm:$0xff]
    %v30 = vld [vmem:[%s1 + $0x18] sm:$0xff]
    %v31 = vld [vmem:[%s1 + $0x20] sm:$0xff]
    %v32 = vld [vmem:[%s1 + $0x28] sm:$0xff]
    %v33 = vld [vmem:[%s1 + $0x30] sm:$0xff]
    %v34 = vld [vmem:[%s1 + $0x38] sm:$0xff]
    %v35 = vld [vmem:[%s1 + $0x40] sm:$0xff]
    %v36 = vld [vmem:[%s1 + $0x48] sm:$0xff]
    %v37 = vld [vmem:[%s1 + $0x50] sm:$0xff]
    %v38 = vld [vmem:[%s1 + $0x58] sm:$0xff]
    %v39 = vld [vmem:[%s1 + $0x60] sm:$0xff]
    %v40 = vld [vmem:[%s1 + $0x68] sm:$0xff]
    %v41 = vld [vmem:[%s1 + $0x70] sm:$0xff]
    %v42 = vld [vmem:[%s1 + $0x78] sm:$0xff]
    %vm43 = vcmask 31744
    %v45 = vsel %vm43, %v27, 0
    %v48 = vsel %vm43, %v28, 0
    %v51 = vsel %vm43, %v29, 0
    %v54 = vsel %vm43, %v30, 0
    %v57 = vsel %vm43, %v31, 0
    %v60 = vsel %vm43, %v32, 0
    %v63 = vsel %vm43, %v33, 0
    %v66 = vsel %vm43, %v34, 0
    %v69 = vsel %vm43, %v35, 0
    %v72 = vsel %vm43, %v36, 0
    %v75 = vsel %vm43, %v37, 0
    %v78 = vsel %vm43, %v38, 0
    %v81 = vsel %vm43, %v39, 0
    %v84 = vsel %vm43, %v40, 0
    %v87 = vsel %vm43, %v41, 0
    %v90 = vsel %vm43, %v42, 0
    %vm92 = vcmask 1043456
    %v94 = vsel %vm92, %v16, 0
    %96 = vmatpush.msra.mxu0 0.0
    %97 = vmatpush.msra.mxu0 0.0
    %98 = vmatpush.msra.mxu0 0.0
    %99 = vmatpush.msra.mxu0 0.0
    %100 = vmatpush.msra.mxu0 0.0
    %101 = vmatpush.msra.mxu0 0.0
    %102 = vmatpush.msra.mxu0 0.0
    %103 = vmatpush.msra.mxu0 0.0
    %104 = vmatpush.msra.mxu0 0.0
    %105 = vmatpush.msra.mxu0 0.0
    %106 = vmatpush.msra.mxu0 0.0
    %107 = vmatpush.msra.mxu0 0.0
    %108 = vmatpush.msra.mxu0 0.0
    %109 = vmatpush.msra.mxu0 0.0
    %110 = vmatpush.msra.mxu0 0.0
    %111 = vmatpush.msra.mxu0 %v94
    %112 = vmatmul.f32.gmra.mxu0 %v45
    %v113 = vpop.f32.mrf.mxu0
    %v114 = vadd.f32 0.0, %v113
    %115 = vmatmul.f32.gmra.mxu0 %v48
    %v116 = vpop.f32.mrf.mxu0
    %v117 = vadd.f32 0.0, %v116
    %118 = vmatmul.f32.gmra.mxu0 %v51
    %v119 = vpop.f32.mrf.mxu0
    %v120 = vadd.f32 0.0, %v119
    %121 = vmatmul.f32.gmra.mxu0 %v54
    %v122 = vpop.f32.mrf.mxu0
    %v123 = vadd.f32 0.0, %v122
    %124 = vmatmul.f32.gmra.mxu0 %v57
    %v125 = vpop.f32.mrf.mxu0
    %v126 = vadd.f32 0.0, %v125
    %127 = vmatmul.f32.gmra.mxu0 %v60
    %v128 = vpop.f32.mrf.mxu0
    %v129 = vadd.f32 0.0, %v128
    %130 = vmatmul.f32.gmra.mxu0 %v63
    %v131 = vpop.f32.mrf.mxu0
    %v132 = vadd.f32 0.0, %v131
    %133 = vmatmul.f32.gmra.mxu0 %v66
    %v134 = vpop.f32.mrf.mxu0
    %v135 = vadd.f32 0.0, %v134
    %136 = vmatmul.f32.gmra.mxu0 %v69
    %v137 = vpop.f32.mrf.mxu0
    %v138 = vadd.f32 0.0, %v137
    %139 = vmatmul.f32.gmra.mxu0 %v72
    %v140 = vpop.f32.mrf.mxu0
    %v141 = vadd.f32 0.0, %v140
    %142 = vmatmul.f32.gmra.mxu0 %v75
    %v143 = vpop.f32.mrf.mxu0
    %v144 = vadd.f32 0.0, %v143
    %145 = vmatmul.f32.gmra.mxu0 %v78
    %v146 = vpop.f32.mrf.mxu0
    %v147 = vadd.f32 0.0, %v146
    %148 = vmatmul.f32.gmra.mxu0 %v81
    %v149 = vpop.f32.mrf.mxu0
    %v150 = vadd.f32 0.0, %v149
    %151 = vmatmul.f32.gmra.mxu0 %v84
    %v152 = vpop.f32.mrf.mxu0
    %v153 = vadd.f32 0.0, %v152
    %154 = vmatmul.f32.gmra.mxu0 %v87
    %v155 = vpop.f32.mrf.mxu0
    %v156 = vadd.f32 0.0, %v155
    %157 = vmatmul.f32.gmra.mxu0 %v90
    %v158 = vpop.f32.mrf.mxu0
    %v159 = vadd.f32 0.0, %v158
    %160 = vdwg.mxu0
    %v161 = vld [vmem:[%s0] sm:$0xff]
    %v162 = vld [vmem:[%s0 + $0x8] sm:$0xff]
    %v163 = vld [vmem:[%s0 + $0x10] sm:$0xff]
    %v164 = vld [vmem:[%s0 + $0x18] sm:$0xff]
    %v165 = vld [vmem:[%s0 + $0x20] sm:$0xff]
    %v166 = vld [vmem:[%s0 + $0x28] sm:$0xff]
    %v167 = vld [vmem:[%s0 + $0x30] sm:$0xff]
    %v168 = vld [vmem:[%s0 + $0x38] sm:$0xff]
    %v169 = vld [vmem:[%s0 + $0x40] sm:$0xff]
    %v170 = vld [vmem:[%s0 + $0x48] sm:$0xff]
    %v171 = vld [vmem:[%s0 + $0x50] sm:$0xff]
    %v172 = vld [vmem:[%s0 + $0x58] sm:$0xff]
    %v173 = vld [vmem:[%s0 + $0x60] sm:$0xff]
    %v174 = vld [vmem:[%s0 + $0x68] sm:$0xff]
    %v175 = vld [vmem:[%s0 + $0x70] sm:$0xff]
    %v176 = vld [vmem:[%s0 + $0x78] sm:$0xff]
    %v177 = vperm.slane %v17, 0
    %178 = vmatpush.msra.mxu0 %v159
    %179 = vmatpush.msra.mxu0 %v156
    %180 = vmatpush.msra.mxu0 %v153
    %181 = vmatpush.msra.mxu0 %v150
    %182 = vmatpush.msra.mxu0 %v147
    %183 = vmatpush.msra.mxu0 %v144
    %184 = vmatpush.msra.mxu0 %v141
    %185 = vmatpush.msra.mxu0 %v138
    %186 = vmatpush.msra.mxu0 %v135
    %187 = vmatpush.msra.mxu0 %v132
    %188 = vmatpush.msra.mxu0 %v129
    %189 = vmatpush.msra.mxu0 %v126
    %190 = vmatpush.msra.mxu0 %v123
    %191 = vmatpush.msra.mxu0 %v120
    %192 = vmatpush.msra.mxu0 %v117
    %193 = vmatpush.msra.mxu0 %v114
    %194 = vmatmul.f32.gmra.mxu0 %v161
    %v195 = vpop.f32.mrf.mxu0
    %v196 = vadd.f32 %v177, %v195
    %197 = vmatmul.f32.gmra.mxu0 %v162
    %v198 = vpop.f32.mrf.mxu0
    %v199 = vadd.f32 %v177, %v198
    %200 = vmatmul.f32.gmra.mxu0 %v163
    %v201 = vpop.f32.mrf.mxu0
    %v202 = vadd.f32 %v177, %v201
    %203 = vmatmul.f32.gmra.mxu0 %v164
    %v204 = vpop.f32.mrf.mxu0
    %v205 = vadd.f32 %v177, %v204
    %206 = vmatmul.f32.gmra.mxu0 %v165
    %v207 = vpop.f32.mrf.mxu0
    %v208 = vadd.f32 %v177, %v207
    %209 = vmatmul.f32.gmra.mxu0 %v166
    %v210 = vpop.f32.mrf.mxu0
    %v211 = vadd.f32 %v177, %v210
    %212 = vmatmul.f32.gmra.mxu0 %v167
    %v213 = vpop.f32.mrf.mxu0
    %v214 = vadd.f32 %v177, %v213
    %215 = vmatmul.f32.gmra.mxu0 %v168
    %v216 = vpop.f32.mrf.mxu0
    %v217 = vadd.f32 %v177, %v216
    %218 = vmatmul.f32.gmra.mxu0 %v169
    %v219 = vpop.f32.mrf.mxu0
    %v220 = vadd.f32 %v177, %v219
    %221 = vmatmul.f32.gmra.mxu0 %v170
    %v222 = vpop.f32.mrf.mxu0
    %v223 = vadd.f32 %v177, %v222
    %224 = vmatmul.f32.gmra.mxu0 %v171
    %v225 = vpop.f32.mrf.mxu0
    %v226 = vadd.f32 %v177, %v225
    %227 = vmatmul.f32.gmra.mxu0 %v172
    %v228 = vpop.f32.mrf.mxu0
    %v229 = vadd.f32 %v177, %v228
    %230 = vmatmul.f32.gmra.mxu0 %v173
    %v231 = vpop.f32.mrf.mxu0
    %v232 = vadd.f32 %v177, %v231
    %233 = vmatmul.f32.gmra.mxu0 %v174
    %v234 = vpop.f32.mrf.mxu0
    %v235 = vadd.f32 %v177, %v234
    %236 = vmatmul.f32.gmra.mxu0 %v175
    %v237 = vpop.f32.mrf.mxu0
    %v238 = vadd.f32 %v177, %v237
    %239 = vmatmul.f32.gmra.mxu0 %v176
    %v240 = vpop.f32.mrf.mxu0
    %v241 = vadd.f32 %v177, %v240
    %242 = vdwg.mxu0
    %v243 = vmax.f32 %v196, 0.0
    %v244 = vmax.f32 %v199, 0.0
    %v245 = vmax.f32 %v202, 0.0
    %v246 = vmax.f32 %v205, 0.0
    %v247 = vmax.f32 %v208, 0.0
    %v248 = vmax.f32 %v211, 0.0
    %v249 = vmax.f32 %v214, 0.0
    %v250 = vmax.f32 %v217, 0.0
    %v251 = vmax.f32 %v220, 0.0
    %v252 = vmax.f32 %v223, 0.0
    %v253 = vmax.f32 %v226, 0.0
    %v254 = vmax.f32 %v229, 0.0
    %v255 = vmax.f32 %v232, 0.0
    %v256 = vmax.f32 %v235, 0.0
    %v257 = vmax.f32 %v238, 0.0
    %v258 = vmax.f32 %v241, 0.0
    %259 = vmatpush.msra.mxu0 %v258
    %260 = vmatpush.msra.mxu0 %v257
    %261 = vmatpush.msra.mxu0 %v256
    %262 = vmatpush.msra.mxu0 %v255
    %263 = vmatpush.msra.mxu0 %v254
    %264 = vmatpush.msra.mxu0 %v253
    %265 = vmatpush.msra.mxu0 %v252
    %266 = vmatpush.msra.mxu0 %v251
    %267 = vmatpush.msra.mxu0 %v250
    %268 = vmatpush.msra.mxu0 %v249
    %269 = vmatpush.msra.mxu0 %v248
    %270 = vmatpush.msra.mxu0 %v247
    %271 = vmatpush.msra.mxu0 %v246
    %272 = vmatpush.msra.mxu0 %v245
    %273 = vmatpush.msra.mxu0 %v244
    %274 = vmatpush.msra.mxu0 %v243
    %275 = vmatmul.f32.gmra.mxu0 %v15
    %v276 = vpop.f32.mrf.mxu0
    %v277 = vadd.f32 0.0, %v276
    %278 = vdwg.mxu0
    %v279 = vperm.slane %v22, 0
    %vm280 = vcmask 130048
    %v282 = vsel %vm280, %v277, 0
    %284 = vmatpush.msra.mxu0 0.0
    %285 = vmatpush.msra.mxu0 0.0
    %286 = vmatpush.msra.mxu0 0.0
    %287 = vmatpush.msra.mxu0 0.0
    %288 = vmatpush.msra.mxu0 0.0
    %289 = vmatpush.msra.mxu0 0.0
    %290 = vmatpush.msra.mxu0 0.0
    %291 = vmatpush.msra.mxu0 0.0
    %292 = vmatpush.msra.mxu0 0.0
    %293 = vmatpush.msra.mxu0 0.0
    %294 = vmatpush.msra.mxu0 0.0
    %295 = vmatpush.msra.mxu0 0.0
    %296 = vmatpush.msra.mxu0 0.0
    %297 = vmatpush.msra.mxu0 0.0
    %298 = vmatpush.msra.mxu0 %v19
    %299 = vmatpush.msra.mxu0 %v18
    %300 = vmatmul.f32.gmra.mxu0 %v282
    %v301 = vpop.f32.mrf.mxu0
    %v302 = vadd.f32 %v279, %v301
    %303 = vdwg.mxu0
    %v305 = vsel %vm280, 0.0, 0
    %307 = vmatpush.msra.mxu0 0.0
    %308 = vmatpush.msra.mxu0 0.0
    %309 = vmatpush.msra.mxu0 0.0
    %310 = vmatpush.msra.mxu0 0.0
    %311 = vmatpush.msra.mxu0 0.0
    %312 = vmatpush.msra.mxu0 0.0
    %313 = vmatpush.msra.mxu0 0.0
    %314 = vmatpush.msra.mxu0 0.0
    %315 = vmatpush.msra.mxu0 0.0
    %316 = vmatpush.msra.mxu0 0.0
    %317 = vmatpush.msra.mxu0 0.0
    %318 = vmatpush.msra.mxu0 0.0
    %319 = vmatpush.msra.mxu0 0.0
    %320 = vmatpush.msra.mxu0 0.0
    %321 = vmatpush.msra.mxu0 %v21
    %322 = vmatpush.msra.mxu0 %v20
    %323 = vmatmul.f32.gmra.mxu0 %v305
    %v324 = vpop.f32.mrf.mxu0
    %v325 = vadd.f32 %v23, %v324
    %326 = vdwg.mxu0
    %v327 = vadd.f32 %v302, %v325
    %v328 = vxor.u32 %v327, 2147483648
    %v329 = vmul.f32 %v328, 1.442695
    %v330 = vpow.pop %v329
    %v331 = vadd.f32 %v330, 1.0
    %v332 = vrcp.pop %v331
    %v333 = vmul.f32 %v331, %v332
    %v334 = vsub.f32 1.0, %v333
    %v335 = vmul.f32 %v332, %v334
    %v336 = vadd.f32 %v332, %v335
    %vm337 = vweird.f32 %v331
    %vm338 = vweird.f32 %v332
    %vm339 = vmor %vm337, %vm338
    %v340 = vsel %vm339, %v332, %v336
    %v341 = vand.u32 2147483647, %v331
    %vm342 = vcmp.eq.f32.partialorder %v341, 8.507059e+37
    %v343 = vand.u32 %v331, 2147483648
    %v344 = vor.u32 1.1754944e-38, %v343
    %v345 = vsel %vm342, %v344, %v340
    %v346 = vmul.f32 1.0, %v345
    %348 = vrot.lane.b32.xlu0 %v325, 96
    %v349 = vpop.permute.xlu0 %348
    %v351 = vmul.f32 %v346, %v349
    %353 = vrot.lane.b32.xlu0 %v351, 32
    %v354 = vpop.permute.xlu0 %353
    %v356 = vadd.f32 %v302, %v354
    %v357 = vtanh.pop %v356
    %v358 = vsub.f32 1.0, %v346
    %360 = vrot.lane.b32.xlu0 %v357, 112
    %v361 = vpop.permute.xlu0 %360
    %v363 = vmul.f32 %v358, %v361
    %v364 = vmul.f32 %v346, 0.0
    %v365 = vadd.f32 %v363, %v364
    %367 = vrot.lane.b32.xlu0 %v365, 112
    %v368 = vpop.permute.xlu0 %367
    %v369 = vsel %vm280, %v368, 0
    %371 = vmatpush.msra.mxu0 0.0
    %372 = vmatpush.msra.mxu0 0.0
    %373 = vmatpush.msra.mxu0 0.0
    %374 = vmatpush.msra.mxu0 0.0
    %375 = vmatpush.msra.mxu0 0.0
    %376 = vmatpush.msra.mxu0 0.0
    %377 = vmatpush.msra.mxu0 0.0
    %378 = vmatpush.msra.mxu0 0.0
    %379 = vmatpush.msra.mxu0 0.0
    %380 = vmatpush.msra.mxu0 0.0
    %381 = vmatpush.msra.mxu0 0.0
    %382 = vmatpush.msra.mxu0 0.0
    %383 = vmatpush.msra.mxu0 0.0
    %384 = vmatpush.msra.mxu0 0.0
    %385 = vmatpush.msra.mxu0 %v21
    %386 = vmatpush.msra.mxu0 %v20
    %387 = vmatmul.f32.gmra.mxu0 %v369
    %v388 = vpop.f32.mrf.mxu0
    %v389 = vadd.f32 %v23, %v388
    %390 = vdwg.mxu0
    %v392 = vrot.slane %v389, 7
    %v394 = vadd.f32 %v302, %v392
    %v395 = vxor.u32 %v394, 2147483648
    %v396 = vmul.f32 %v395, 1.442695
    %v397 = vpow.pop %v396
    %v398 = vadd.f32 %v397, 1.0
    %v399 = vrcp.pop %v398
    %v400 = vmul.f32 %v398, %v399
    %v401 = vsub.f32 1.0, %v400
    %v402 = vmul.f32 %v399, %v401
    %v403 = vadd.f32 %v399, %v402
    %vm404 = vweird.f32 %v398
    %vm405 = vweird.f32 %v399
    %vm406 = vmor %vm404, %vm405
    %v407 = vsel %vm406, %v399, %v403
    %v408 = vand.u32 2147483647, %v398
    %vm409 = vcmp.eq.f32.partialorder %v408, 8.507059e+37
    %v410 = vand.u32 %v398, 2147483648
    %v411 = vor.u32 1.1754944e-38, %v410
    %v412 = vsel %vm409, %v411, %v407
    %v413 = vmul.f32 1.0, %v412
    %414 = vrot.lane.b32.xlu0 %v392, 96
    %v415 = vpop.permute.xlu0 %414
    %v417 = vmul.f32 %v413, %v415
    %419 = vrot.lane.b32.xlu0 %v417, 32
    %v420 = vpop.permute.xlu0 %419
    %v422 = vadd.f32 %v302, %v420
    %v423 = vtanh.pop %v422
    %v424 = vsub.f32 1.0, %v413
    %426 = vrot.lane.b32.xlu0 %v423, 112
    %v427 = vpop.permute.xlu0 %426
    %v429 = vmul.f32 %v424, %v427
    %v430 = vrot.slane %v365, 7
    %v432 = vmul.f32 %v413, %v430
    %v433 = vadd.f32 %v429, %v432
    %v435 = vrot.slane %v433, 1
    %436 = vrot.lane.b32.xlu0 %v435, 112
    %v437 = vpop.permute.xlu0 %436
    %v438 = vsel %vm280, %v437, 0
    %440 = vmatpush.msra.mxu0 0.0
    %441 = vmatpush.msra.mxu0 0.0
    %442 = vmatpush.msra.mxu0 0.0
    %443 = vmatpush.msra.mxu0 0.0
    %444 = vmatpush.msra.mxu0 0.0
    %445 = vmatpush.msra.mxu0 0.0
    %446 = vmatpush.msra.mxu0 0.0
    %447 = vmatpush.msra.mxu0 0.0
    %448 = vmatpush.msra.mxu0 0.0
    %449 = vmatpush.msra.mxu0 0.0
    %450 = vmatpush.msra.mxu0 0.0
    %451 = vmatpush.msra.mxu0 0.0
    %452 = vmatpush.msra.mxu0 0.0
    %453 = vmatpush.msra.mxu0 0.0
    %454 = vmatpush.msra.mxu0 %v21
    %455 = vmatpush.msra.mxu0 %v20
    %456 = vmatmul.f32.gmra.mxu0 %v438
    %v457 = vpop.f32.mrf.mxu0
    %v458 = vadd.f32 %v23, %v457
    %459 = vdwg.mxu0
    %v461 = vrot.slane %v458, 6
    %v463 = vadd.f32 %v302, %v461
    %v464 = vxor.u32 %v463, 2147483648
    %v465 = vmul.f32 %v464, 1.442695
    %v466 = vpow.pop %v465
    %v467 = vadd.f32 %v466, 1.0
    %v468 = vrcp.pop %v467
    %v469 = vmul.f32 %v467, %v468
    %v470 = vsub.f32 1.0, %v469
    %v471 = vmul.f32 %v468, %v470
    %v472 = vadd.f32 %v468, %v471
    %vm473 = vweird.f32 %v467
    %vm474 = vweird.f32 %v468
    %vm475 = vmor %vm473, %vm474
    %v476 = vsel %vm475, %v468, %v472
    %v477 = vand.u32 2147483647, %v467
    %vm478 = vcmp.eq.f32.partialorder %v477, 8.507059e+37
    %v479 = vand.u32 %v467, 2147483648
    %v480 = vor.u32 1.1754944e-38, %v479
    %v481 = vsel %vm478, %v480, %v476
    %v482 = vmul.f32 1.0, %v481
    %483 = vrot.lane.b32.xlu0 %v461, 96
    %v484 = vpop.permute.xlu0 %483
    %v486 = vmul.f32 %v482, %v484
    %488 = vrot.lane.b32.xlu0 %v486, 32
    %v489 = vpop.permute.xlu0 %488
    %v491 = vadd.f32 %v302, %v489
    %v492 = vtanh.pop %v491
    %v493 = vsub.f32 1.0, %v482
    %495 = vrot.lane.b32.xlu0 %v492, 112
    %v496 = vpop.permute.xlu0 %495
    %v498 = vmul.f32 %v493, %v496
    %v499 = vrot.slane %v433, 7
    %v501 = vmul.f32 %v482, %v499
    %v502 = vadd.f32 %v498, %v501
    %v504 = vrot.slane %v502, 2
    %505 = vrot.lane.b32.xlu0 %v504, 112
    %v506 = vpop.permute.xlu0 %505
    %v507 = vsel %vm280, %v506, 0
    %509 = vmatpush.msra.mxu0 0.0
    %510 = vmatpush.msra.mxu0 0.0
    %511 = vmatpush.msra.mxu0 0.0
    %512 = vmatpush.msra.mxu0 0.0
    %513 = vmatpush.msra.mxu0 0.0
    %514 = vmatpush.msra.mxu0 0.0
    %515 = vmatpush.msra.mxu0 0.0
    %516 = vmatpush.msra.mxu0 0.0
    %517 = vmatpush.msra.mxu0 0.0
    %518 = vmatpush.msra.mxu0 0.0
    %519 = vmatpush.msra.mxu0 0.0
    %520 = vmatpush.msra.mxu0 0.0
    %521 = vmatpush.msra.mxu0 0.0
    %522 = vmatpush.msra.mxu0 0.0
    %523 = vmatpush.msra.mxu0 %v21
    %524 = vmatpush.msra.mxu0 %v20
    %525 = vmatmul.f32.gmra.mxu0 %v507
    %v526 = vpop.f32.mrf.mxu0
    %v527 = vadd.f32 %v23, %v526
    %528 = vdwg.mxu0
    %v530 = vrot.slane %v527, 5
    %v532 = vadd.f32 %v302, %v530
    %v533 = vxor.u32 %v532, 2147483648
    %v534 = vmul.f32 %v533, 1.442695
    %v535 = vpow.pop %v534
    %v536 = vadd.f32 %v535, 1.0
    %v537 = vrcp.pop %v536
    %v538 = vmul.f32 %v536, %v537
    %v539 = vsub.f32 1.0, %v538
    %v540 = vmul.f32 %v537, %v539
    %v541 = vadd.f32 %v537, %v540
    %vm542 = vweird.f32 %v536
    %vm543 = vweird.f32 %v537
    %vm544 = vmor %vm542, %vm543
    %v545 = vsel %vm544, %v537, %v541
    %v546 = vand.u32 2147483647, %v536
    %vm547 = vcmp.eq.f32.partialorder %v546, 8.507059e+37
    %v548 = vand.u32 %v536, 2147483648
    %v549 = vor.u32 1.1754944e-38, %v548
    %v550 = vsel %vm547, %v549, %v545
    %v551 = vmul.f32 1.0, %v550
    %552 = vrot.lane.b32.xlu0 %v530, 96
    %v553 = vpop.permute.xlu0 %552
    %v555 = vmul.f32 %v551, %v553
    %557 = vrot.lane.b32.xlu0 %v555, 32
    %v558 = vpop.permute.xlu0 %557
    %v560 = vadd.f32 %v302, %v558
    %v561 = vtanh.pop %v560
    %v562 = vsub.f32 1.0, %v551
    %564 = vrot.lane.b32.xlu0 %v561, 112
    %v565 = vpop.permute.xlu0 %564
    %v567 = vmul.f32 %v562, %v565
    %v568 = vrot.slane %v502, 7
    %v570 = vmul.f32 %v551, %v568
    %v571 = vadd.f32 %v567, %v570
    %v573 = vrot.slane %v571, 3
    %574 = vrot.lane.b32.xlu0 %v573, 112
    %v575 = vpop.permute.xlu0 %574
    %v576 = vsel %vm280, %v575, 0
    %578 = vmatpush.msra.mxu0 0.0
    %579 = vmatpush.msra.mxu0 0.0
    %580 = vmatpush.msra.mxu0 0.0
    %581 = vmatpush.msra.mxu0 0.0
    %582 = vmatpush.msra.mxu0 0.0
    %583 = vmatpush.msra.mxu0 0.0
    %584 = vmatpush.msra.mxu0 0.0
    %585 = vmatpush.msra.mxu0 0.0
    %586 = vmatpush.msra.mxu0 0.0
    %587 = vmatpush.msra.mxu0 0.0
    %588 = vmatpush.msra.mxu0 0.0
    %589 = vmatpush.msra.mxu0 0.0
    %590 = vmatpush.msra.mxu0 0.0
    %591 = vmatpush.msra.mxu0 0.0
    %592 = vmatpush.msra.mxu0 %v21
    %593 = vmatpush.msra.mxu0 %v20
    %594 = vmatmul.f32.gmra.mxu0 %v576
    %v595 = vpop.f32.mrf.mxu0
    %v596 = vadd.f32 %v23, %v595
    %597 = vdwg.mxu0
    %v599 = vrot.slane %v596, 4
    %v601 = vadd.f32 %v302, %v599
    %v602 = vxor.u32 %v601, 2147483648
    %v603 = vmul.f32 %v602, 1.442695
    %v604 = vpow.pop %v603
    %v605 = vadd.f32 %v604, 1.0
    %v606 = vrcp.pop %v605
    %v607 = vmul.f32 %v605, %v606
    %v608 = vsub.f32 1.0, %v607
    %v609 = vmul.f32 %v606, %v608
    %v610 = vadd.f32 %v606, %v609
    %vm611 = vweird.f32 %v605
    %vm612 = vweird.f32 %v606
    %vm613 = vmor %vm611, %vm612
    %v614 = vsel %vm613, %v606, %v610
    %v615 = vand.u32 2147483647, %v605
    %vm616 = vcmp.eq.f32.partialorder %v615, 8.507059e+37
    %v617 = vand.u32 %v605, 2147483648
    %v618 = vor.u32 1.1754944e-38, %v617
    %v619 = vsel %vm616, %v618, %v614
    %v620 = vmul.f32 1.0, %v619
    %621 = vrot.lane.b32.xlu0 %v599, 96
    %v622 = vpop.permute.xlu0 %621
    %v624 = vmul.f32 %v620, %v622
    %626 = vrot.lane.b32.xlu0 %v624, 32
    %v627 = vpop.permute.xlu0 %626
    %v629 = vadd.f32 %v302, %v627
    %v630 = vtanh.pop %v629
    %v631 = vsub.f32 1.0, %v620
    %633 = vrot.lane.b32.xlu0 %v630, 112
    %v634 = vpop.permute.xlu0 %633
    %v636 = vmul.f32 %v631, %v634
    %v637 = vrot.slane %v571, 7
    %v639 = vmul.f32 %v620, %v637
    %v640 = vadd.f32 %v636, %v639
    %v642 = vrot.slane %v640, 4
    %643 = vrot.lane.b32.xlu0 %v642, 112
    %v644 = vpop.permute.xlu0 %643
    %v645 = vsel %vm280, %v644, 0
    %647 = vmatpush.msra.mxu0 0.0
    %648 = vmatpush.msra.mxu0 0.0
    %649 = vmatpush.msra.mxu0 0.0
    %650 = vmatpush.msra.mxu0 0.0
    %651 = vmatpush.msra.mxu0 0.0
    %652 = vmatpush.msra.mxu0 0.0
    %653 = vmatpush.msra.mxu0 0.0
    %654 = vmatpush.msra.mxu0 0.0
    %655 = vmatpush.msra.mxu0 0.0
    %656 = vmatpush.msra.mxu0 0.0
    %657 = vmatpush.msra.mxu0 0.0
    %658 = vmatpush.msra.mxu0 0.0
    %659 = vmatpush.msra.mxu0 0.0
    %660 = vmatpush.msra.mxu0 0.0
    %661 = vmatpush.msra.mxu0 %v21
    %662 = vmatpush.msra.mxu0 %v20
    %663 = vmatmul.f32.gmra.mxu0 %v645
    %v664 = vpop.f32.mrf.mxu0
    %v665 = vadd.f32 %v23, %v664
    %666 = vdwg.mxu0
    %v668 = vrot.slane %v665, 3
    %v670 = vadd.f32 %v302, %v668
    %v671 = vxor.u32 %v670, 2147483648
    %v672 = vmul.f32 %v671, 1.442695
    %v673 = vpow.pop %v672
    %v674 = vadd.f32 %v673, 1.0
    %v675 = vrcp.pop %v674
    %v676 = vmul.f32 %v674, %v675
    %v677 = vsub.f32 1.0, %v676
    %v678 = vmul.f32 %v675, %v677
    %v679 = vadd.f32 %v675, %v678
    %vm680 = vweird.f32 %v674
    %vm681 = vweird.f32 %v675
    %vm682 = vmor %vm680, %vm681
    %v683 = vsel %vm682, %v675, %v679
    %v684 = vand.u32 2147483647, %v674
    %vm685 = vcmp.eq.f32.partialorder %v684, 8.507059e+37
    %v686 = vand.u32 %v674, 2147483648
    %v687 = vor.u32 1.1754944e-38, %v686
    %v688 = vsel %vm685, %v687, %v683
    %v689 = vmul.f32 1.0, %v688
    %690 = vrot.lane.b32.xlu0 %v668, 96
    %v691 = vpop.permute.xlu0 %690
    %v693 = vmul.f32 %v689, %v691
    %695 = vrot.lane.b32.xlu0 %v693, 32
    %v696 = vpop.permute.xlu0 %695
    %v698 = vadd.f32 %v302, %v696
    %v699 = vtanh.pop %v698
    %v700 = vsub.f32 1.0, %v689
    %702 = vrot.lane.b32.xlu0 %v699, 112
    %v703 = vpop.permute.xlu0 %702
    %v705 = vmul.f32 %v700, %v703
    %v706 = vrot.slane %v640, 7
    %v708 = vmul.f32 %v689, %v706
    %v709 = vadd.f32 %v705, %v708
    %v711 = vrot.slane %v709, 5
    %712 = vrot.lane.b32.xlu0 %v711, 112
    %v713 = vpop.permute.xlu0 %712
    %v714 = vsel %vm280, %v713, 0
    %716 = vmatpush.msra.mxu0 0.0
    %717 = vmatpush.msra.mxu0 0.0
    %718 = vmatpush.msra.mxu0 0.0
    %719 = vmatpush.msra.mxu0 0.0
    %720 = vmatpush.msra.mxu0 0.0
    %721 = vmatpush.msra.mxu0 0.0
    %722 = vmatpush.msra.mxu0 0.0
    %723 = vmatpush.msra.mxu0 0.0
    %724 = vmatpush.msra.mxu0 0.0
    %725 = vmatpush.msra.mxu0 0.0
    %726 = vmatpush.msra.mxu0 0.0
    %727 = vmatpush.msra.mxu0 0.0
    %728 = vmatpush.msra.mxu0 0.0
    %729 = vmatpush.msra.mxu0 0.0
    %730 = vmatpush.msra.mxu0 %v21
    %731 = vmatpush.msra.mxu0 %v20
    %732 = vmatmul.f32.gmra.mxu0 %v714
    %v733 = vpop.f32.mrf.mxu0
    %v734 = vadd.f32 %v23, %v733
    %735 = vdwg.mxu0
    %v737 = vrot.slane %v734, 2
    %v739 = vadd.f32 %v302, %v737
    %v740 = vxor.u32 %v739, 2147483648
    %v741 = vmul.f32 %v740, 1.442695
    %v742 = vpow.pop %v741
    %v743 = vadd.f32 %v742, 1.0
    %v744 = vrcp.pop %v743
    %v745 = vmul.f32 %v743, %v744
    %v746 = vsub.f32 1.0, %v745
    %v747 = vmul.f32 %v744, %v746
    %v748 = vadd.f32 %v744, %v747
    %vm749 = vweird.f32 %v743
    %vm750 = vweird.f32 %v744
    %vm751 = vmor %vm749, %vm750
    %v752 = vsel %vm751, %v744, %v748
    %v753 = vand.u32 2147483647, %v743
    %vm754 = vcmp.eq.f32.partialorder %v753, 8.507059e+37
    %v755 = vand.u32 %v743, 2147483648
    %v756 = vor.u32 1.1754944e-38, %v755
    %v757 = vsel %vm754, %v756, %v752
    %v758 = vmul.f32 1.0, %v757
    %759 = vrot.lane.b32.xlu0 %v737, 96
    %v760 = vpop.permute.xlu0 %759
    %v762 = vmul.f32 %v758, %v760
    %764 = vrot.lane.b32.xlu0 %v762, 32
    %v765 = vpop.permute.xlu0 %764
    %v767 = vadd.f32 %v302, %v765
    %v768 = vtanh.pop %v767
    %v769 = vsub.f32 1.0, %v758
    %771 = vrot.lane.b32.xlu0 %v768, 112
    %v772 = vpop.permute.xlu0 %771
    %v774 = vmul.f32 %v769, %v772
    %v775 = vrot.slane %v709, 7
    %v777 = vmul.f32 %v758, %v775
    %v778 = vadd.f32 %v774, %v777
    %v780 = vrot.slane %v778, 6
    %781 = vrot.lane.b32.xlu0 %v780, 112
    %v782 = vpop.permute.xlu0 %781
    %v783 = vsel %vm280, %v782, 0
    %785 = vmatpush.msra.mxu0 0.0
    %786 = vmatpush.msra.mxu0 0.0
    %787 = vmatpush.msra.mxu0 0.0
    %788 = vmatpush.msra.mxu0 0.0
    %789 = vmatpush.msra.mxu0 0.0
    %790 = vmatpush.msra.mxu0 0.0
    %791 = vmatpush.msra.mxu0 0.0
    %792 = vmatpush.msra.mxu0 0.0
    %793 = vmatpush.msra.mxu0 0.0
    %794 = vmatpush.msra.mxu0 0.0
    %795 = vmatpush.msra.mxu0 0.0
    %796 = vmatpush.msra.mxu0 0.0
    %797 = vmatpush.msra.mxu0 0.0
    %798 = vmatpush.msra.mxu0 0.0
    %799 = vmatpush.msra.mxu0 %v21
    %800 = vmatpush.msra.mxu0 %v20
    %801 = vmatmul.f32.gmra.mxu0 %v783
    %v802 = vpop.f32.mrf.mxu0
    %v803 = vadd.f32 %v23, %v802
    %804 = vdwg.mxu0
    %v806 = vrot.slane %v803, 1
    %v808 = vadd.f32 %v302, %v806
    %v809 = vxor.u32 %v808, 2147483648
    %v810 = vmul.f32 %v809, 1.442695
    %v811 = vpow.pop %v810
    %v812 = vadd.f32 %v811, 1.0
    %v813 = vrcp.pop %v812
    %v814 = vmul.f32 %v812, %v813
    %v815 = vsub.f32 1.0, %v814
    %v816 = vmul.f32 %v813, %v815
    %v817 = vadd.f32 %v813, %v816
    %vm818 = vweird.f32 %v812
    %vm819 = vweird.f32 %v813
    %vm820 = vmor %vm818, %vm819
    %v821 = vsel %vm820, %v813, %v817
    %v822 = vand.u32 2147483647, %v812
    %vm823 = vcmp.eq.f32.partialorder %v822, 8.507059e+37
    %v824 = vand.u32 %v812, 2147483648
    %v825 = vor.u32 1.1754944e-38, %v824
    %v826 = vsel %vm823, %v825, %v821
    %v827 = vmul.f32 1.0, %v826
    %828 = vrot.lane.b32.xlu0 %v806, 96
    %v829 = vpop.permute.xlu0 %828
    %v831 = vmul.f32 %v827, %v829
    %833 = vrot.lane.b32.xlu0 %v831, 32
    %v834 = vpop.permute.xlu0 %833
    %v836 = vadd.f32 %v302, %v834
    %v837 = vtanh.pop %v836
    %v838 = vsub.f32 1.0, %v827
    %840 = vrot.lane.b32.xlu0 %v837, 112
    %v841 = vpop.permute.xlu0 %840
    %v843 = vmul.f32 %v838, %v841
    %v844 = vrot.slane %v778, 7
    %v846 = vmul.f32 %v827, %v844
    %v847 = vadd.f32 %v843, %v846
    %v848 = vmax.f32 %v847, -10.0
    %v849 = vmin.f32 %v848, 10.0
    %v851 = vrot.slane %v849, 7
    %852 = vrot.lane.b32.xlu0 %v851, 112
    %v853 = vpop.permute.xlu0 %852
    %v854 = vsel %vm280, %v853, 0
    %856 = vmatpush.msra.mxu0 0.0
    %857 = vmatpush.msra.mxu0 0.0
    %858 = vmatpush.msra.mxu0 0.0
    %859 = vmatpush.msra.mxu0 0.0
    %860 = vmatpush.msra.mxu0 0.0
    %861 = vmatpush.msra.mxu0 0.0
    %862 = vmatpush.msra.mxu0 0.0
    %863 = vmatpush.msra.mxu0 0.0
    %864 = vmatpush.msra.mxu0 0.0
    %865 = vmatpush.msra.mxu0 0.0
    %866 = vmatpush.msra.mxu0 0.0
    %867 = vmatpush.msra.mxu0 0.0
    %868 = vmatpush.msra.mxu0 0.0
    %869 = vmatpush.msra.mxu0 0.0
    %870 = vmatpush.msra.mxu0 %v25
    %871 = vmatpush.msra.mxu0 %v24
    %872 = vmatmul.f32.gmra.mxu0 %v854
    %v873 = vpop.f32.mrf.mxu0
    %v874 = vadd.f32 %v26, %v873
    %875 = vdwg.mxu0
    %vm876 = vcmask 32768
    %877 = vst.msk [vmem:[#allocation2] sm:$0x1] %vm876, %v874
    // Predicated region
    $region14: #{temporal_gnn_forward.1} parent=1 // pred_check
      _
    $region15: #{temporal_gnn_forward.1} parent=1 // pred_check_branch
      %879 = sbr.rel (0) target = $region17
    $region16: #{temporal_gnn_forward.1} parent=1 // pred_region
      %881 = vsyncadd [#allocation3], 0
      %s883 = sshll.u32 [#allocation2], 4
      %s884 = int_to_ptr.vmem [resolvable:$true] %s883
      %s885 = sshll.u32 %s3, 4
      %s886 = int_to_ptr.hbm [resolvable:$true] %s885
      %888 = dma.vmem_to_hbm [thread:$0]  %s884, 16, %s886, [#allocation3]
    $region17: #{temporal_gnn_forward.1} parent=1 // pred_fallthru
      _
    // Predicated region
    $region18: #{temporal_gnn_forward.1} parent=1 // pred_check
      _
    $region19: #{temporal_gnn_forward.1} parent=1 // pred_check_branch
      %890 = sbr.rel (0) target = $region21
    $region20: #{temporal_gnn_forward.1} parent=1 // pred_region
      %892 = dma.done [#allocation3], 16
    $region21: #{temporal_gnn_forward.1} parent=1 // pred_fallthru
      _
    %893 = vsyncpa [#allocation3], 1

</llo_original>
